<compile_context>
chip_gen: v6e
topology: v6e:2x2x1
jax: 0.10.0
libtpu: 0.0.40
codegen_flags: <defaults>
</compile_context>

<pallas_src>
import functools
import math

import jax
import jax.numpy as jnp
from jax.experimental import pallas as pl
from jax.experimental.pallas import tpu as pltpu

LANE = 128
SUBLANE = 8


def _round_up(x, m):
    return ((x + m - 1) // m) * m


def _mlp_kernel(x_ref,
                w1_ref, b1_ref,
                w2_ref, b2_ref,
                w3_ref, b3_ref,
                w4_ref, b4_ref,
                o_ref, *, act_dtype):
    """Fused 4x (matmul -> bias -> tanh).

    MXU inputs are bf16, accumulation is f32; the bias-add + tanh epilogue
    runs in `act_dtype` (bf16 on v6e/v7x, f32 on v5e).
    """

    def layer(h_bf16, w_ref, b_ref):
        acc = jnp.dot(h_bf16, w_ref[...], preferred_element_type=jnp.float32)
        return jnp.tanh(acc.astype(act_dtype) + b_ref[...])

    h = x_ref[...].astype(jnp.bfloat16)
    h = layer(h, w1_ref, b1_ref).astype(jnp.bfloat16)
    h = layer(h, w2_ref, b2_ref).astype(jnp.bfloat16)
    h = layer(h, w3_ref, b3_ref).astype(jnp.bfloat16)
    o_ref[...] = layer(h, w4_ref, b4_ref).astype(o_ref.dtype)


def _default_act_dtype():
    try:
        kind = jax.devices()[0].device_kind.lower()
    except Exception:
        return jnp.bfloat16
    # v5e-and-older have no bf16 VPU/EUP path -> keep the epilogue in f32.
    if any(tag in kind for tag in ("v2", "v3", "v4", "v5")):
        return jnp.float32
    return jnp.bfloat16


def _choose_batch_tile(batch, tb_cap):
    """Batch tile: multiple of 8, <= tb_cap, minimal batch padding, prefer
    >=2 grid steps (so both v7x TensorCores get work), then the largest tile."""
    tb_cap = max(SUBLANE, (tb_cap // SUBLANE) * SUBLANE)
    upper = min(tb_cap, _round_up(batch, SUBLANE))
    best_tb, best_key = SUBLANE, None
    for tb in range(SUBLANE, upper + 1, SUBLANE):
        padded = _round_up(batch, tb)
        key = (padded - batch, 0 if padded // tb >= 2 else 1, -tb)
        if best_key is None or key < best_key:
            best_key, best_tb = key, tb
    return best_tb


def mlp_forward(x, params, *, out_dtype=jnp.bfloat16, act_dtype=None,
                max_block_b=2048, vmem_budget_bytes=24 << 20):
    """Fused 4-layer tanh MLP.

    x: (B, input_size), float32 or bfloat16.
    params: dict with w1..w4 in (in, out) layout and b1..b4 of shape (1, out).
    Returns (B, output_size) in `out_dtype`.
    """
    B, in_size = x.shape
    hid_size = params["w1"].shape[1]
    out_size = params["w4"].shape[1]
    if act_dtype is None:
        act_dtype = _default_act_dtype()

    # Hidden/output feature dims lane-padded to 128; x / layer-1 K unpadded.
    Hp = _round_up(hid_size, LANE)
    Op = _round_up(out_size, LANE)

    def pad_w(w, rp, cp):
        r, c = w.shape
        return jnp.pad(w, ((0, rp - r), (0, cp - c))).astype(jnp.bfloat16)

    def pad_b(b, cp):
        b = b.reshape(1, -1)
        return jnp.pad(b, ((0, 0), (0, cp - b.shape[1]))).astype(act_dtype)

    w1 = pad_w(params["w1"], in_size, Hp); b1 = pad_b(params["b1"], Hp)
    w2 = pad_w(params["w2"], Hp, Hp);      b2 = pad_b(params["b2"], Hp)
    w3 = pad_w(params["w3"], Hp, Hp);      b3 = pad_b(params["b3"], Hp)
    w4 = pad_w(params["w4"], Hp, Op);      b4 = pad_b(params["b4"], Op)
    weights = (w1, b1, w2, b2, w3, b3, w4, b4)
    weight_bytes = sum(a.size * a.dtype.itemsize for a in weights)

    # Batch tile from a VMEM budget: double-buffered x/out streams plus a
    # rough allowance for f32 intermediates.
    out_itemsize = jnp.dtype(out_dtype).itemsize
    per_row = (2 * (in_size * x.dtype.itemsize + Op * out_itemsize)
               + 6 * Hp * 4)
    avail = max(vmem_budget_bytes - 2 * weight_bytes, SUBLANE * per_row)
    tb_cap = min(max_block_b, max(SUBLANE, avail // per_row))
    tb = _choose_batch_tile(B, tb_cap)
    Bp = _round_up(B, tb)
    x_in = x if Bp == B else jnp.pad(x, ((0, Bp - B), (0, 0)))
    grid = (Bp // tb,)

    flops = 2 * Bp * (in_size * Hp + 2 * Hp * Hp + Hp * Op)
    transcendentals = Bp * (3 * Hp + Op)
    bytes_accessed = (x_in.size * x_in.dtype.itemsize
                      + Bp * Op * out_itemsize + weight_bytes)
    needed_vmem = (2 * weight_bytes
                   + 2 * tb * (in_size * x.dtype.itemsize + Op * out_itemsize)
                   + 6 * tb * Hp * 4 + (2 << 20))
    vmem_limit = int(min(64 << 20, max(32 << 20, needed_vmem)))

    kernel = functools.partial(_mlp_kernel, act_dtype=act_dtype)

    def call(buffered_weights):
        def resident(arr):
            if buffered_weights:
                # Block index never changes -> a single VMEM buffer suffices.
                return pl.BlockSpec(arr.shape, lambda i: (0, 0),
                                    pipeline_mode=pl.Buffered(1))
            return pl.BlockSpec(arr.shape, lambda i: (0, 0))

        return pl.pallas_call(
            kernel,
            out_shape=jax.ShapeDtypeStruct((Bp, Op), out_dtype),
            grid=grid,
            in_specs=[pl.BlockSpec((tb, in_size), lambda i: (i, 0))]
                     + [resident(a) for a in weights],
            out_specs=pl.BlockSpec((tb, Op), lambda i: (i, 0)),
            compiler_params=pltpu.CompilerParams(
                dimension_semantics=("parallel",),
                vmem_limit_bytes=vmem_limit),
            cost_estimate=pl.CostEstimate(
                flops=flops,
                transcendentals=transcendentals,
                bytes_accessed=bytes_accessed),
        )(x_in, *weights)

    try:
        out_pad = call(True)
        out_pad = jax.block_until_ready(out_pad)
    except Exception:
        # pipeline_mode / Buffered(1) unsupported on this jax version: fall
        # back to default (double-buffered) resident weight specs.
        out_pad = call(False)

    return out_pad[:B, :out_size]


def init_mlp_params(key, input_size, hidden_size, output_size=None):
    """Match the PyTorch module's shapes/init.

    Weights: xavier_uniform (nn.init.xavier_uniform_), stored transposed as
    (in, out).  Biases: nn.Linear default U(-1/sqrt(fan_in), 1/sqrt(fan_in)).
    """
    if output_size is None:
        output_size = hidden_size

    dims = [(input_size, hidden_size),
            (hidden_size, hidden_size),
            (hidden_size, hidden_size),
            (hidden_size, output_size)]

    params = {}
    for i, (fan_in, fan_out) in enumerate(dims, start=1):
        key, wk, bk = jax.random.split(key, 3)
        w_bound = math.sqrt(6.0 / (fan_in + fan_out))
        params[f"w{i}"] = jax.random.uniform(
            wk, (fan_in, fan_out), jnp.float32, minval=-w_bound, maxval=w_bound)
        b_bound = 1.0 / math.sqrt(fan_in)
        params[f"b{i}"] = jax.random.uniform(
            bk, (1, fan_out), jnp.float32, minval=-b_bound, maxval=b_bound)
    return params


def mlp_reference(x, params):
    """Plain-JAX f32 reference of the same forward pass."""
    h = jnp.tanh(x @ params["w1"] + params["b1"])
    h = jnp.tanh(h @ params["w2"] + params["b2"])
    h = jnp.tanh(h @ params["w3"] + params["b3"])
    return jnp.tanh(h @ params["w4"] + params["b4"])


if __name__ == "__main__":
    key = jax.random.PRNGKey(0)
    key, xk, pk = jax.random.split(key, 3)

    batch = 8
    input_size = 16
    hidden_size = 32
    output_size = None  # defaults to hidden_size, as in the PyTorch module

    params = init_mlp_params(pk, input_size, hidden_size, output_size)
    x = jax.random.normal(xk, (batch, input_size), jnp.float32)

    out = jax.block_until_ready(mlp_forward(x, params))

    ref = mlp_reference(x, params)
    assert out.shape == ref.shape, (out.shape, ref.shape)
    # bf16 MXU inputs, bf16 epilogue (on v6e/v7x) and bf16 output vs. the
    # f32 reference -> tolerance loosened accordingly.
    max_err = float(jnp.max(jnp.abs(out.astype(jnp.float32) - ref)))
    assert max_err < 4e-2, f"mismatch, max|err|={max_err}"

    print("KERNEL_OK")
</pallas_src>

<mosaic_0001>
module attributes {stable_mosaic.version = 11 : i64} {
  func.func @_mlp_kernel(%arg0: i32, %arg1: memref<8x16xf32, #tpu.memory_space<vmem>>, %arg2: memref<16x128xbf16, #tpu.memory_space<vmem>>, %arg3: memref<1x128xbf16, #tpu.memory_space<vmem>>, %arg4: memref<128x128xbf16, #tpu.memory_space<vmem>>, %arg5: memref<1x128xbf16, #tpu.memory_space<vmem>>, %arg6: memref<128x128xbf16, #tpu.memory_space<vmem>>, %arg7: memref<1x128xbf16, #tpu.memory_space<vmem>>, %arg8: memref<128x128xbf16, #tpu.memory_space<vmem>>, %arg9: memref<1x128xbf16, #tpu.memory_space<vmem>>, %arg10: memref<8x128xbf16, #tpu.memory_space<vmem>>) attributes {dimension_semantics = [#tpu.dimension_semantics<parallel>], iteration_bounds = array<i64: 1>, scalar_prefetch = 0 : i64, scratch_operands = 0 : i64, tpu.core_type = #tpu.core_type<tc>, window_params = [{transform_indices = @transform_0, window_bounds = array<i64: 8, 16>}, {pipeline_mode = #tpu.pipeline_mode<synchronous>, transform_indices = @transform_1, window_bounds = array<i64: 16, 128>}, {pipeline_mode = #tpu.pipeline_mode<synchronous>, transform_indices = @transform_2, window_bounds = array<i64: 1, 128>}, {pipeline_mode = #tpu.pipeline_mode<synchronous>, transform_indices = @transform_3, window_bounds = array<i64: 128, 128>}, {pipeline_mode = #tpu.pipeline_mode<synchronous>, transform_indices = @transform_4, window_bounds = array<i64: 1, 128>}, {pipeline_mode = #tpu.pipeline_mode<synchronous>, transform_indices = @transform_5, window_bounds = array<i64: 128, 128>}, {pipeline_mode = #tpu.pipeline_mode<synchronous>, transform_indices = @transform_6, window_bounds = array<i64: 1, 128>}, {pipeline_mode = #tpu.pipeline_mode<synchronous>, transform_indices = @transform_7, window_bounds = array<i64: 128, 128>}, {pipeline_mode = #tpu.pipeline_mode<synchronous>, transform_indices = @transform_8, window_bounds = array<i64: 1, 128>}, {transform_indices = @transform_9, window_bounds = array<i64: 8, 128>}]} {
    %c0 = arith.constant 0 : index
    %c0_0 = arith.constant 0 : index
    %0 = vector.load %arg1[%c0, %c0_0] : memref<8x16xf32, #tpu.memory_space<vmem>>, vector<8x16xf32>
    %1 = arith.truncf %0 : vector<8x16xf32> to vector<8x16xbf16>
    %c0_1 = arith.constant 0 : index
    %c0_2 = arith.constant 0 : index
    %2 = vector.load %arg2[%c0_1, %c0_2] : memref<16x128xbf16, #tpu.memory_space<vmem>>, vector<16x128xbf16>
    %cst = arith.constant dense<0.000000e+00> : vector<8x128xf32>
    %3 = tpu.matmul %1, %2, %cst {dimension_numbers = #tpu.dot_dimension_numbers<[1], [0], [0], [1], [0, 0, 1, 1], [], []>} : vector<8x16xbf16>, vector<16x128xbf16>, vector<8x128xf32> -> vector<8x128xf32>
    %4 = arith.truncf %3 : vector<8x128xf32> to vector<8x128xbf16>
    %c0_3 = arith.constant 0 : index
    %c0_4 = arith.constant 0 : index
    %5 = vector.load %arg3[%c0_3, %c0_4] : memref<1x128xbf16, #tpu.memory_space<vmem>>, vector<1x128xbf16>
    %6 = vector.broadcast %5 : vector<1x128xbf16> to vector<8x128xbf16>
    %7 = arith.addf %4, %6 : vector<8x128xbf16>
    %8 = math.tanh %7 : vector<8x128xbf16>
    %c0_5 = arith.constant 0 : index
    %c0_6 = arith.constant 0 : index
    %9 = vector.load %arg4[%c0_5, %c0_6] : memref<128x128xbf16, #tpu.memory_space<vmem>>, vector<128x128xbf16>
    %cst_7 = arith.constant dense<0.000000e+00> : vector<8x128xf32>
    %10 = tpu.matmul %8, %9, %cst_7 {dimension_numbers = #tpu.dot_dimension_numbers<[1], [0], [0], [1], [0, 0, 1, 1], [], []>} : vector<8x128xbf16>, vector<128x128xbf16>, vector<8x128xf32> -> vector<8x128xf32>
    %11 = arith.truncf %10 : vector<8x128xf32> to vector<8x128xbf16>
    %c0_8 = arith.constant 0 : index
    %c0_9 = arith.constant 0 : index
    %12 = vector.load %arg5[%c0_8, %c0_9] : memref<1x128xbf16, #tpu.memory_space<vmem>>, vector<1x128xbf16>
    %13 = vector.broadcast %12 : vector<1x128xbf16> to vector<8x128xbf16>
    %14 = arith.addf %11, %13 : vector<8x128xbf16>
    %15 = math.tanh %14 : vector<8x128xbf16>
    %c0_10 = arith.constant 0 : index
    %c0_11 = arith.constant 0 : index
    %16 = vector.load %arg6[%c0_10, %c0_11] : memref<128x128xbf16, #tpu.memory_space<vmem>>, vector<128x128xbf16>
    %cst_12 = arith.constant dense<0.000000e+00> : vector<8x128xf32>
    %17 = tpu.matmul %15, %16, %cst_12 {dimension_numbers = #tpu.dot_dimension_numbers<[1], [0], [0], [1], [0, 0, 1, 1], [], []>} : vector<8x128xbf16>, vector<128x128xbf16>, vector<8x128xf32> -> vector<8x128xf32>
    %18 = arith.truncf %17 : vector<8x128xf32> to vector<8x128xbf16>
    %c0_13 = arith.constant 0 : index
    %c0_14 = arith.constant 0 : index
    %19 = vector.load %arg7[%c0_13, %c0_14] : memref<1x128xbf16, #tpu.memory_space<vmem>>, vector<1x128xbf16>
    %20 = vector.broadcast %19 : vector<1x128xbf16> to vector<8x128xbf16>
    %21 = arith.addf %18, %20 : vector<8x128xbf16>
    %22 = math.tanh %21 : vector<8x128xbf16>
    %c0_15 = arith.constant 0 : index
    %c0_16 = arith.constant 0 : index
    %23 = vector.load %arg8[%c0_15, %c0_16] : memref<128x128xbf16, #tpu.memory_space<vmem>>, vector<128x128xbf16>
    %cst_17 = arith.constant dense<0.000000e+00> : vector<8x128xf32>
    %24 = tpu.matmul %22, %23, %cst_17 {dimension_numbers = #tpu.dot_dimension_numbers<[1], [0], [0], [1], [0, 0, 1, 1], [], []>} : vector<8x128xbf16>, vector<128x128xbf16>, vector<8x128xf32> -> vector<8x128xf32>
    %25 = arith.truncf %24 : vector<8x128xf32> to vector<8x128xbf16>
    %c0_18 = arith.constant 0 : index
    %c0_19 = arith.constant 0 : index
    %26 = vector.load %arg9[%c0_18, %c0_19] : memref<1x128xbf16, #tpu.memory_space<vmem>>, vector<1x128xbf16>
    %27 = vector.broadcast %26 : vector<1x128xbf16> to vector<8x128xbf16>
    %28 = arith.addf %25, %27 : vector<8x128xbf16>
    %29 = math.tanh %28 : vector<8x128xbf16>
    %c0_20 = arith.constant 0 : index
    %c0_21 = arith.constant 0 : index
    %30 = vector.load %arg10[%c0_20, %c0_21] : memref<8x128xbf16, #tpu.memory_space<vmem>>, vector<8x128xbf16>
    tpu.vector_store %arg10[%c0_20, %c0_21], %29 {strides = array<i32>} : memref<8x128xbf16, #tpu.memory_space<vmem>>, vector<8x128xbf16>,
    return
  }
  func.func @transform_0(%arg0: i32) -> (i32, i32) {
    %c0_i32 = arith.constant 0 : i32
    %c0_i32_0 = arith.constant 0 : i32
    return %arg0, %c0_i32 : i32, i32
  }
  func.func @transform_1(%arg0: i32) -> (i32, i32) {
    %c0_i32 = arith.constant 0 : i32
    %c0_i32_0 = arith.constant 0 : i32
    %c0_i32_1 = arith.constant 0 : i32
    return %c0_i32, %c0_i32_0 : i32, i32
  }
  func.func @transform_2(%arg0: i32) -> (i32, i32) {
    %c0_i32 = arith.constant 0 : i32
    %c0_i32_0 = arith.constant 0 : i32
    %c0_i32_1 = arith.constant 0 : i32
    return %c0_i32, %c0_i32_0 : i32, i32
  }
  func.func @transform_3(%arg0: i32) -> (i32, i32) {
    %c0_i32 = arith.constant 0 : i32
    %c0_i32_0 = arith.constant 0 : i32
    %c0_i32_1 = arith.constant 0 : i32
    return %c0_i32, %c0_i32_0 : i32, i32
  }
  func.func @transform_4(%arg0: i32) -> (i32, i32) {
    %c0_i32 = arith.constant 0 : i32
    %c0_i32_0 = arith.constant 0 : i32
    %c0_i32_1 = arith.constant 0 : i32
    return %c0_i32, %c0_i32_0 : i32, i32
  }
  func.func @transform_5(%arg0: i32) -> (i32, i32) {
    %c0_i32 = arith.constant 0 : i32
    %c0_i32_0 = arith.constant 0 : i32
    %c0_i32_1 = arith.constant 0 : i32
    return %c0_i32, %c0_i32_0 : i32, i32
  }
  func.func @transform_6(%arg0: i32) -> (i32, i32) {
    %c0_i32 = arith.constant 0 : i32
    %c0_i32_0 = arith.constant 0 : i32
    %c0_i32_1 = arith.constant 0 : i32
    return %c0_i32, %c0_i32_0 : i32, i32
  }
  func.func @transform_7(%arg0: i32) -> (i32, i32) {
    %c0_i32 = arith.constant 0 : i32
    %c0_i32_0 = arith.constant 0 : i32
    %c0_i32_1 = arith.constant 0 : i32
    return %c0_i32, %c0_i32_0 : i32, i32
  }
  func.func @transform_8(%arg0: i32) -> (i32, i32) {
    %c0_i32 = arith.constant 0 : i32
    %c0_i32_0 = arith.constant 0 : i32
    %c0_i32_1 = arith.constant 0 : i32
    return %c0_i32, %c0_i32_0 : i32, i32
  }
  func.func @transform_9(%arg0: i32) -> (i32, i32) {
    %c0_i32 = arith.constant 0 : i32
    %c0_i32_0 = arith.constant 0 : i32
    return %arg0, %c0_i32 : i32, i32
  }
}

module attributes {stable_mosaic.version = 11 : i64} {
  func.func @_mlp_kernel(%arg0: i32, %arg1: memref<8x16xf32, #tpu.memory_space<vmem>>, %arg2: memref<16x128xbf16, #tpu.memory_space<vmem>>, %arg3: memref<1x128xbf16, #tpu.memory_space<vmem>>, %arg4: memref<128x128xbf16, #tpu.memory_space<vmem>>, %arg5: memref<1x128xbf16, #tpu.memory_space<vmem>>, %arg6: memref<128x128xbf16, #tpu.memory_space<vmem>>, %arg7: memref<1x128xbf16, #tpu.memory_space<vmem>>, %arg8: memref<128x128xbf16, #tpu.memory_space<vmem>>, %arg9: memref<1x128xbf16, #tpu.memory_space<vmem>>, %arg10: memref<8x128xbf16, #tpu.memory_space<vmem>>) attributes {dimension_semantics = [#tpu.dimension_semantics<parallel>], iteration_bounds = array<i64: 1>, scalar_prefetch = 0 : i64, scratch_operands = 0 : i64, tpu.core_type = #tpu.core_type<tc>, window_params = [{transform_indices = @transform_0, window_bounds = array<i64: 8, 16>}, {pipeline_mode = #tpu.pipeline_mode<synchronous>, transform_indices = @transform_1, window_bounds = array<i64: 16, 128>}, {pipeline_mode = #tpu.pipeline_mode<synchronous>, transform_indices = @transform_2, window_bounds = array<i64: 1, 128>}, {pipeline_mode = #tpu.pipeline_mode<synchronous>, transform_indices = @transform_3, window_bounds = array<i64: 128, 128>}, {pipeline_mode = #tpu.pipeline_mode<synchronous>, transform_indices = @transform_4, window_bounds = array<i64: 1, 128>}, {pipeline_mode = #tpu.pipeline_mode<synchronous>, transform_indices = @transform_5, window_bounds = array<i64: 128, 128>}, {pipeline_mode = #tpu.pipeline_mode<synchronous>, transform_indices = @transform_6, window_bounds = array<i64: 1, 128>}, {pipeline_mode = #tpu.pipeline_mode<synchronous>, transform_indices = @transform_7, window_bounds = array<i64: 128, 128>}, {pipeline_mode = #tpu.pipeline_mode<synchronous>, transform_indices = @transform_8, window_bounds = array<i64: 1, 128>}, {transform_indices = @transform_9, window_bounds = array<i64: 8, 128>}]} {
    %c0 = arith.constant 0 : index
    %c0_0 = arith.constant 0 : index
    %0 = vector.load %arg1[%c0, %c0_0] : memref<8x16xf32, #tpu.memory_space<vmem>>, vector<8x16xf32>
    %1 = arith.truncf %0 : vector<8x16xf32> to vector<8x16xbf16>
    %c0_1 = arith.constant 0 : index
    %c0_2 = arith.constant 0 : index
    %2 = vector.load %arg2[%c0_1, %c0_2] : memref<16x128xbf16, #tpu.memory_space<vmem>>, vector<16x128xbf16>
    %cst = arith.constant dense<0.000000e+00> : vector<8x128xf32>
    %3 = tpu.matmul %1, %2, %cst {dimension_numbers = #tpu.dot_dimension_numbers<[1], [0], [0], [1], [0, 0, 1, 1], [], []>} : vector<8x16xbf16>, vector<16x128xbf16>, vector<8x128xf32> -> vector<8x128xf32>
    %4 = arith.truncf %3 : vector<8x128xf32> to vector<8x128xbf16>
    %c0_3 = arith.constant 0 : index
    %c0_4 = arith.constant 0 : index
    %5 = vector.load %arg3[%c0_3, %c0_4] : memref<1x128xbf16, #tpu.memory_space<vmem>>, vector<1x128xbf16>
    %6 = vector.broadcast %5 : vector<1x128xbf16> to vector<8x128xbf16>
    %7 = arith.addf %4, %6 : vector<8x128xbf16>
    %8 = math.tanh %7 : vector<8x128xbf16>
    %c0_5 = arith.constant 0 : index
    %c0_6 = arith.constant 0 : index
    %9 = vector.load %arg4[%c0_5, %c0_6] : memref<128x128xbf16, #tpu.memory_space<vmem>>, vector<128x128xbf16>
    %cst_7 = arith.constant dense<0.000000e+00> : vector<8x128xf32>
    %10 = tpu.matmul %8, %9, %cst_7 {dimension_numbers = #tpu.dot_dimension_numbers<[1], [0], [0], [1], [0, 0, 1, 1], [], []>} : vector<8x128xbf16>, vector<128x128xbf16>, vector<8x128xf32> -> vector<8x128xf32>
    %11 = arith.truncf %10 : vector<8x128xf32> to vector<8x128xbf16>
    %c0_8 = arith.constant 0 : index
    %c0_9 = arith.constant 0 : index
    %12 = vector.load %arg5[%c0_8, %c0_9] : memref<1x128xbf16, #tpu.memory_space<vmem>>, vector<1x128xbf16>
    %13 = vector.broadcast %12 : vector<1x128xbf16> to vector<8x128xbf16>
    %14 = arith.addf %11, %13 : vector<8x128xbf16>
    %15 = math.tanh %14 : vector<8x128xbf16>
    %c0_10 = arith.constant 0 : index
    %c0_11 = arith.constant 0 : index
    %16 = vector.load %arg6[%c0_10, %c0_11] : memref<128x128xbf16, #tpu.memory_space<vmem>>, vector<128x128xbf16>
    %cst_12 = arith.constant dense<0.000000e+00> : vector<8x128xf32>
    %17 = tpu.matmul %15, %16, %cst_12 {dimension_numbers = #tpu.dot_dimension_numbers<[1], [0], [0], [1], [0, 0, 1, 1], [], []>} : vector<8x128xbf16>, vector<128x128xbf16>, vector<8x128xf32> -> vector<8x128xf32>
    %18 = arith.truncf %17 : vector<8x128xf32> to vector<8x128xbf16>
    %c0_13 = arith.constant 0 : index
    %c0_14 = arith.constant 0 : index
    %19 = vector.load %arg7[%c0_13, %c0_14] : memref<1x128xbf16, #tpu.memory_space<vmem>>, vector<1x128xbf16>
    %20 = vector.broadcast %19 : vector<1x128xbf16> to vector<8x128xbf16>
    %21 = arith.addf %18, %20 : vector<8x128xbf16>
    %22 = math.tanh %21 : vector<8x128xbf16>
    %c0_15 = arith.constant 0 : index
    %c0_16 = arith.constant 0 : index
    %23 = vector.load %arg8[%c0_15, %c0_16] : memref<128x128xbf16, #tpu.memory_space<vmem>>, vector<128x128xbf16>
    %cst_17 = arith.constant dense<0.000000e+00> : vector<8x128xf32>
    %24 = tpu.matmul %22, %23, %cst_17 {dimension_numbers = #tpu.dot_dimension_numbers<[1], [0], [0], [1], [0, 0, 1, 1], [], []>} : vector<8x128xbf16>, vector<128x128xbf16>, vector<8x128xf32> -> vector<8x128xf32>
    %25 = arith.truncf %24 : vector<8x128xf32> to vector<8x128xbf16>
    %c0_18 = arith.constant 0 : index
    %c0_19 = arith.constant 0 : index
    %26 = vector.load %arg9[%c0_18, %c0_19] : memref<1x128xbf16, #tpu.memory_space<vmem>>, vector<1x128xbf16>
    %27 = vector.broadcast %26 : vector<1x128xbf16> to vector<8x128xbf16>
    %28 = arith.addf %25, %27 : vector<8x128xbf16>
    %29 = math.tanh %28 : vector<8x128xbf16>
    %c0_20 = arith.constant 0 : index
    %c0_21 = arith.constant 0 : index
    %30 = vector.load %arg10[%c0_20, %c0_21] : memref<8x128xbf16, #tpu.memory_space<vmem>>, vector<8x128xbf16>
    tpu.vector_store %arg10[%c0_20, %c0_21], %29 {strides = array<i32>} : memref<8x128xbf16, #tpu.memory_space<vmem>>, vector<8x128xbf16>,
    return
  }
  func.func @transform_0(%arg0: i32) -> (i32, i32) {
    %c0_i32 = arith.constant 0 : i32
    %c0_i32_0 = arith.constant 0 : i32
    return %arg0, %c0_i32 : i32, i32
  }
  func.func @transform_1(%arg0: i32) -> (i32, i32) {
    %c0_i32 = arith.constant 0 : i32
    %c0_i32_0 = arith.constant 0 : i32
    %c0_i32_1 = arith.constant 0 : i32
    return %c0_i32, %c0_i32_0 : i32, i32
  }
  func.func @transform_2(%arg0: i32) -> (i32, i32) {
    %c0_i32 = arith.constant 0 : i32
    %c0_i32_0 = arith.constant 0 : i32
    %c0_i32_1 = arith.constant 0 : i32
    return %c0_i32, %c0_i32_0 : i32, i32
  }
  func.func @transform_3(%arg0: i32) -> (i32, i32) {
    %c0_i32 = arith.constant 0 : i32
    %c0_i32_0 = arith.constant 0 : i32
    %c0_i32_1 = arith.constant 0 : i32
    return %c0_i32, %c0_i32_0 : i32, i32
  }
  func.func @transform_4(%arg0: i32) -> (i32, i32) {
    %c0_i32 = arith.constant 0 : i32
    %c0_i32_0 = arith.constant 0 : i32
    %c0_i32_1 = arith.constant 0 : i32
    return %c0_i32, %c0_i32_0 : i32, i32
  }
  func.func @transform_5(%arg0: i32) -> (i32, i32) {
    %c0_i32 = arith.constant 0 : i32
    %c0_i32_0 = arith.constant 0 : i32
    %c0_i32_1 = arith.constant 0 : i32
    return %c0_i32, %c0_i32_0 : i32, i32
  }
  func.func @transform_6(%arg0: i32) -> (i32, i32) {
    %c0_i32 = arith.constant 0 : i32
    %c0_i32_0 = arith.constant 0 : i32
    %c0_i32_1 = arith.constant 0 : i32
    return %c0_i32, %c0_i32_0 : i32, i32
  }
  func.func @transform_7(%arg0: i32) -> (i32, i32) {
    %c0_i32 = arith.constant 0 : i32
    %c0_i32_0 = arith.constant 0 : i32
    %c0_i32_1 = arith.constant 0 : i32
    return %c0_i32, %c0_i32_0 : i32, i32
  }
  func.func @transform_8(%arg0: i32) -> (i32, i32) {
    %c0_i32 = arith.constant 0 : i32
    %c0_i32_0 = arith.constant 0 : i32
    %c0_i32_1 = arith.constant 0 : i32
    return %c0_i32, %c0_i32_0 : i32, i32
  }
  func.func @transform_9(%arg0: i32) -> (i32, i32) {
    %c0_i32 = arith.constant 0 : i32
    %c0_i32_0 = arith.constant 0 : i32
    return %arg0, %c0_i32 : i32, i32
  }
}

</mosaic_0001>

<llo_original>
// kernel: tpu_custom_call.1
$region0: #{tpu_custom_call.1}
  #allocation0 [shape = 'u32[]', space=smem, size = 0x4, offset = 0x4, fixed_abs, tag = 'smem constant byte address 0x4 - core index']
  #allocation1 [shape = 'u32[144,128]{1,0:T(1,128)}', space=vmem, size = 0x12000, scoped, tag = 'internal scratch']
  %s0 = inlined_call_operand.hbm [shape: f32[8,16], index: 0, kind: input, shape index: {}]
  %s1 = inlined_call_operand.hbm [shape: bf16[16,128], index: 1, kind: input, shape index: {}]
  %s2 = inlined_call_operand.vmem [shape: bf16[1,128], index: 2, kind: input, shape index: {}]
  %s3 = inlined_call_operand.hbm [shape: bf16[128,128], index: 3, kind: input, shape index: {}]
  %s4 = inlined_call_operand.vmem [shape: bf16[1,128], index: 4, kind: input, shape index: {}]
  %s5 = inlined_call_operand.hbm [shape: bf16[128,128], index: 5, kind: input, shape index: {}]
  %s6 = inlined_call_operand.vmem [shape: bf16[1,128], index: 6, kind: input, shape index: {}]
  %s7 = inlined_call_operand.hbm [shape: bf16[128,128], index: 7, kind: input, shape index: {}]
  %s8 = inlined_call_operand.vmem [shape: bf16[1,128], index: 8, kind: input, shape index: {}]
  %s9 = inlined_call_operand.hbm [shape: bf16[8,128], index: 9, kind: output, shape index: {}]
  %s10 = sld [smem:[#allocation0]]
  $region66: #{tpu_custom_call.1} parent=0
    _
  %s12 = ssub.s32 1, %s10
  %s13 = scalar_select 0, %s12, %s10
  $region1: #{tpu_custom_call.1} parent=0
    #allocation2 [shape = 'u8[4096]{0}', space=vmem, size = 0x1000, scoped, tag = 'input window, operand 0, single buffered']
    #allocation3 [shape = 's32[1]{0}', space=sflag, size = 0x4, scoped, tag = 'scoped memory for tpu_custom_call.1']
    #allocation4 [shape = 's32[1]{0}', space=sflag, size = 0x4, scoped, tag = 'scoped memory for tpu_custom_call.1']
    #allocation5 [shape = 'u8[4096]{0}', space=vmem, size = 0x1000, scoped, tag = 'input window, operand 1, single buffered']
    #allocation6 [shape = 's32[1]{0}', space=sflag, size = 0x4, scoped, tag = 'scoped memory for tpu_custom_call.1']
    #allocation7 [shape = 'u8[32768]{0}', space=vmem, size = 0x8000, scoped, tag = 'input window, operand 3, single buffered']
    #allocation8 [shape = 'u8[32768]{0}', space=vmem, size = 0x8000, scoped, tag = 'input window, operand 5, single buffered']
    #allocation9 [shape = 's32[1]{0}', space=sflag, size = 0x4, scoped, tag = 'scoped memory for tpu_custom_call.1']
    #allocation10 [shape = 'u8[32768]{0}', space=vmem, size = 0x8000, scoped, tag = 'input window, operand 7, single buffered']
    #allocation11 [shape = 'u8[2048]{0}', space=vmem, size = 0x800, scoped, tag = 'output window, operand 0, single buffered']
    %14 = vsyncpa [#allocation3], 0
    %15 = vsyncpa [#allocation6], 0
    %16 = vsyncpa [#allocation9], 0
    %17 = vsyncpa [#allocation4], 0
    // Predicated region
    $region2: #{tpu_custom_call.1} parent=1 // pred_check
      _
    $region3: #{tpu_custom_call.1} parent=1 // pred_check_branch
      %19 = sbr.rel (0) target = $region5
    $region4: #{tpu_custom_call.1} parent=1 // pred_region
      %s21 = ssub.s32 128, 128
      %22 = vsyncadd [#allocation3], %s21
      %s24 = sshll.u32 [#allocation2], 4
      %s25 = int_to_ptr.vmem [resolvable:$true] %s24
      %27 = dma.hbm_to_vmem [thread:$0]  %s0, 128, %s25, [#allocation3]
    $region5: #{tpu_custom_call.1} parent=1 // pred_fallthru
      _
    // Predicated region
    $region6: #{tpu_custom_call.1} parent=1 // pred_check
      _
    $region7: #{tpu_custom_call.1} parent=1 // pred_check_branch
      %29 = sbr.rel (0) target = $region9
    $region8: #{tpu_custom_call.1} parent=1 // pred_region
      %s31 = ssub.s32 128, 128
      %32 = vsyncadd [#allocation6], %s31
      %s33 = sshll.u32 [#allocation5], 4
      %s34 = int_to_ptr.vmem [resolvable:$true] %s33
      %39 = dma.hbm_to_vmem [thread:$0]  %s1, 128, %s34, [#allocation6], 64, 64, 4
    $region9: #{tpu_custom_call.1} parent=1 // pred_fallthru
      _
    // Predicated region
    $region10: #{tpu_custom_call.1} parent=1 // pred_check
      _
    $region11: #{tpu_custom_call.1} parent=1 // pred_check_branch
      %41 = sbr.rel (0) target = $region13
    $region12: #{tpu_custom_call.1} parent=1 // pred_region
      _
    $region13: #{tpu_custom_call.1} parent=1 // pred_fallthru
      _
    // Predicated region
    $region14: #{tpu_custom_call.1} parent=1 // pred_check
      _
    $region15: #{tpu_custom_call.1} parent=1 // pred_check_branch
      %43 = sbr.rel (0) target = $region17
    $region16: #{tpu_custom_call.1} parent=1 // pred_region
      %s45 = ssub.s32 1024, 1024
      %46 = vsyncadd [#allocation6], %s45
      %s47 = sshll.u32 [#allocation7], 4
      %s48 = int_to_ptr.vmem [resolvable:$true] %s47
      %53 = dma.hbm_to_vmem [thread:$0]  %s3, 1024, %s48, [#allocation6], 64, 64, 4
    $region17: #{tpu_custom_call.1} parent=1 // pred_fallthru
      _
    // Predicated region
    $region18: #{tpu_custom_call.1} parent=1 // pred_check
      _
    $region19: #{tpu_custom_call.1} parent=1 // pred_check_branch
      %55 = sbr.rel (0) target = $region21
    $region20: #{tpu_custom_call.1} parent=1 // pred_region
      _
    $region21: #{tpu_custom_call.1} parent=1 // pred_fallthru
      _
    // Predicated region
    $region22: #{tpu_custom_call.1} parent=1 // pred_check
      _
    $region23: #{tpu_custom_call.1} parent=1 // pred_check_branch
      %57 = sbr.rel (0) target = $region25
    $region24: #{tpu_custom_call.1} parent=1 // pred_region
      %s59 = ssub.s32 1024, 1024
      %60 = vsyncadd [#allocation9], %s59
      %s61 = sshll.u32 [#allocation8], 4
      %s62 = int_to_ptr.vmem [resolvable:$true] %s61
      %67 = dma.hbm_to_vmem [thread:$0]  %s5, 1024, %s62, [#allocation9], 64, 64, 4
    $region25: #{tpu_custom_call.1} parent=1 // pred_fallthru
      _
    // Predicated region
    $region26: #{tpu_custom_call.1} parent=1 // pred_check
      _
    $region27: #{tpu_custom_call.1} parent=1 // pred_check_branch
      %69 = sbr.rel (0) target = $region29
    $region28: #{tpu_custom_call.1} parent=1 // pred_region
      _
    $region29: #{tpu_custom_call.1} parent=1 // pred_fallthru
      _
    // Predicated region
    $region30: #{tpu_custom_call.1} parent=1 // pred_check
      _
    $region31: #{tpu_custom_call.1} parent=1 // pred_check_branch
      %71 = sbr.rel (0) target = $region33
    $region32: #{tpu_custom_call.1} parent=1 // pred_region
      %s73 = ssub.s32 1024, 1024
      %74 = vsyncadd [#allocation9], %s73
      %s75 = sshll.u32 [#allocation10], 4
      %s76 = int_to_ptr.vmem [resolvable:$true] %s75
      %81 = dma.hbm_to_vmem [thread:$0]  %s7, 1024, %s76, [#allocation9], 64, 64, 4
    $region33: #{tpu_custom_call.1} parent=1 // pred_fallthru
      _
    // Predicated region
    $region34: #{tpu_custom_call.1} parent=1 // pred_check
      _
    $region35: #{tpu_custom_call.1} parent=1 // pred_check_branch
      %83 = sbr.rel (0) target = $region37
    $region36: #{tpu_custom_call.1} parent=1 // pred_region
      _
    $region37: #{tpu_custom_call.1} parent=1 // pred_fallthru
      _
    // Predicated region
    $region38: #{tpu_custom_call.1} parent=1 // pred_check
      _
    $region39: #{tpu_custom_call.1} parent=1 // pred_check_branch
      %85 = sbr.rel (0) target = $region41
    $region40: #{tpu_custom_call.1} parent=1 // pred_region
      %86 = dma.done [#allocation3], 128
    $region41: #{tpu_custom_call.1} parent=1 // pred_fallthru
      _
    // Predicated region
    $region42: #{tpu_custom_call.1} parent=1 // pred_check
      _
    $region43: #{tpu_custom_call.1} parent=1 // pred_check_branch
      %88 = sbr.rel (0) target = $region45
    $region44: #{tpu_custom_call.1} parent=1 // pred_region
      %89 = dma.done [#allocation6], 128
    $region45: #{tpu_custom_call.1} parent=1 // pred_fallthru
      _
    // Predicated region
    $region46: #{tpu_custom_call.1} parent=1 // pred_check
      _
    $region47: #{tpu_custom_call.1} parent=1 // pred_check_branch
      %91 = sbr.rel (0) target = $region49
    $region48: #{tpu_custom_call.1} parent=1 // pred_region
      %92 = dma.done [#allocation6], 1024
    $region49: #{tpu_custom_call.1} parent=1 // pred_fallthru
      _
    // Predicated region
    $region50: #{tpu_custom_call.1} parent=1 // pred_check
      _
    $region51: #{tpu_custom_call.1} parent=1 // pred_check_branch
      %94 = sbr.rel (0) target = $region53
    $region52: #{tpu_custom_call.1} parent=1 // pred_region
      %95 = dma.done [#allocation9], 1024
    $region53: #{tpu_custom_call.1} parent=1 // pred_fallthru
      _
    // Predicated region
    $region54: #{tpu_custom_call.1} parent=1 // pred_check
      _
    $region55: #{tpu_custom_call.1} parent=1 // pred_check_branch
      %97 = sbr.rel (0) target = $region57
    $region56: #{tpu_custom_call.1} parent=1 // pred_region
      %98 = dma.done [#allocation9], 1024
    $region57: #{tpu_custom_call.1} parent=1 // pred_fallthru
      _
    %v100 = vld [vmem:[#allocation2] sm:$0xff]
    %v101 = vpack.c.bf16 %v100, %v100
    %v102 = vld [vmem:[#allocation5] sm:$0xf]
    %v103 = vld [vmem:[#allocation5 + $0x4] sm:$0xf]
    %v106 = vunpack.c.l.b16 %v102
    %v107 = vunpack.c.l.b16 %v103
    %v108 = vpack.c.b16 %v107, %v106
    %vm110 = vcmask 130048
    %v112 = vsel %vm110, %v101, 0
    %114 = vmatprep.subr.bf16.mxu0 0
    %115 = vmatpush1.bf16.msra.mxu0 0
    %116 = vmatprep.subr.bf16.mxu0 0
    %117 = vmatpush1.bf16.msra.mxu0 0
    %118 = vmatprep.subr.bf16.mxu0 0
    %119 = vmatpush1.bf16.msra.mxu0 0
    %120 = vmatprep.subr.bf16.mxu0 0
    %121 = vmatpush1.bf16.msra.mxu0 0
    %122 = vmatprep.subr.bf16.mxu0 0
    %123 = vmatpush1.bf16.msra.mxu0 0
    %124 = vmatprep.subr.bf16.mxu0 0
    %125 = vmatpush1.bf16.msra.mxu0 0
    %126 = vmatprep.subr.bf16.mxu0 0
    %127 = vmatpush1.bf16.msra.mxu0 0
    %128 = vmatprep.subr.bf16.mxu0 0
    %129 = vmatpush1.bf16.msra.mxu0 %v108
    %130 = vmatprep.subr.bf16.mxu0 0
    %131 = vmatpush2.bf16.msra.mxu0 0
    %132 = vmatprep.subr.bf16.mxu0 0
    %133 = vmatpush2.bf16.msra.mxu0 0
    %134 = vmatprep.subr.bf16.mxu0 0
    %135 = vmatpush2.bf16.msra.mxu0 0
    %136 = vmatprep.subr.bf16.mxu0 0
    %137 = vmatpush2.bf16.msra.mxu0 0
    %138 = vmatprep.subr.bf16.mxu0 0
    %139 = vmatpush2.bf16.msra.mxu0 0
    %140 = vmatprep.subr.bf16.mxu0 0
    %141 = vmatpush2.bf16.msra.mxu0 0
    %142 = vmatprep.subr.bf16.mxu0 0
    %143 = vmatpush2.bf16.msra.mxu0 0
    %144 = vmatprep.subr.bf16.mxu0 0
    %145 = vmatpush2.bf16.msra.mxu0 0
    %146 = vmatprep.mubr.bf16.mxu0 0
    %147 = vmatmul.mubr.bf16.gmra.mxu0 %v112
    %v148 = vpop.f32.mrf.mxu0
    %v149 = vadd.f32 0.0, %v148
    %v150 = vpop.f32.mrf.mxu0
    %v151 = vpop.f32.mrf.mxu0
    %v152 = vpop.f32.mrf.mxu0
    %153 = vdwg.mxu0
    %v154 = vpack.c.bf16 %v149, %v149
    %v155 = vld [vmem:[%s2] sm:$0x1]
    %v157 = vpack.i.b16 %v155, %v155
    %v159 = vlaneseq
    %v160 = vshrl.u32 %v159, 7
    %v161 = vsub.s32 0, %v160
    %v162 = vrot.slane %v157, %v161
    %v163 = vadd.bf16 %v154, %v162
    %v164 = vtanh.bf16.pop %v163
    %v165 = vld [vmem:[#allocation7] sm:$0xf]
    %v166 = vld [vmem:[#allocation7 + $0x4] sm:$0xf]
    %v167 = vld [vmem:[#allocation7 + $0x8] sm:$0xf]
    %v168 = vld [vmem:[#allocation7 + $0xc] sm:$0xf]
    %v169 = vld [vmem:[#allocation7 + $0x10] sm:$0xf]
    %v170 = vld [vmem:[#allocation7 + $0x14] sm:$0xf]
    %v171 = vld [vmem:[#allocation7 + $0x18] sm:$0xf]
    %v172 = vld [vmem:[#allocation7 + $0x1c] sm:$0xf]
    %v173 = vld [vmem:[#allocation7 + $0x20] sm:$0xf]
    %v174 = vld [vmem:[#allocation7 + $0x24] sm:$0xf]
    %v175 = vld [vmem:[#allocation7 + $0x28] sm:$0xf]
    %v176 = vld [vmem:[#allocation7 + $0x2c] sm:$0xf]
    %v177 = vld [vmem:[#allocation7 + $0x30] sm:$0xf]
    %v178 = vld [vmem:[#allocation7 + $0x34] sm:$0xf]
    %v179 = vld [vmem:[#allocation7 + $0x38] sm:$0xf]
    %v180 = vld [vmem:[#allocation7 + $0x3c] sm:$0xf]
    %v197 = vunpack.c.l.b16 %v165
    %v198 = vunpack.c.l.b16 %v166
    %v199 = vunpack.c.l.b16 %v167
    %v200 = vunpack.c.l.b16 %v168
    %v201 = vunpack.c.l.b16 %v169
    %v202 = vunpack.c.l.b16 %v170
    %v203 = vunpack.c.l.b16 %v171
    %v204 = vunpack.c.l.b16 %v172
    %v205 = vunpack.c.l.b16 %v173
    %v206 = vunpack.c.l.b16 %v174
    %v207 = vunpack.c.l.b16 %v175
    %v208 = vunpack.c.l.b16 %v176
    %v209 = vunpack.c.l.b16 %v177
    %v210 = vunpack.c.l.b16 %v178
    %v211 = vunpack.c.l.b16 %v179
    %v212 = vunpack.c.l.b16 %v180
    %v213 = vpack.c.b16 %v198, %v197
    %v214 = vpack.c.b16 %v200, %v199
    %v215 = vpack.c.b16 %v202, %v201
    %v216 = vpack.c.b16 %v204, %v203
    %v217 = vpack.c.b16 %v206, %v205
    %v218 = vpack.c.b16 %v208, %v207
    %v219 = vpack.c.b16 %v210, %v209
    %v220 = vpack.c.b16 %v212, %v211
    %229 = vmatprep.subr.bf16.mxu0 0
    %230 = vmatpush1.bf16.msra.mxu0 %v220
    %231 = vmatprep.subr.bf16.mxu0 0
    %232 = vmatpush1.bf16.msra.mxu0 %v219
    %233 = vmatprep.subr.bf16.mxu0 0
    %234 = vmatpush1.bf16.msra.mxu0 %v218
    %235 = vmatprep.subr.bf16.mxu0 0
    %236 = vmatpush1.bf16.msra.mxu0 %v217
    %237 = vmatprep.subr.bf16.mxu0 0
    %238 = vmatpush1.bf16.msra.mxu0 %v216
    %239 = vmatprep.subr.bf16.mxu0 0
    %240 = vmatpush1.bf16.msra.mxu0 %v215
    %241 = vmatprep.subr.bf16.mxu0 0
    %242 = vmatpush1.bf16.msra.mxu0 %v214
    %243 = vmatprep.subr.bf16.mxu0 0
    %244 = vmatpush1.bf16.msra.mxu0 %v213
    %245 = vmatprep.subr.bf16.mxu0 0
    %246 = vmatpush2.bf16.msra.mxu0 0
    %247 = vmatprep.subr.bf16.mxu0 0
    %248 = vmatpush2.bf16.msra.mxu0 0
    %249 = vmatprep.subr.bf16.mxu0 0
    %250 = vmatpush2.bf16.msra.mxu0 0
    %251 = vmatprep.subr.bf16.mxu0 0
    %252 = vmatpush2.bf16.msra.mxu0 0
    %253 = vmatprep.subr.bf16.mxu0 0
    %254 = vmatpush2.bf16.msra.mxu0 0
    %255 = vmatprep.subr.bf16.mxu0 0
    %256 = vmatpush2.bf16.msra.mxu0 0
    %257 = vmatprep.subr.bf16.mxu0 0
    %258 = vmatpush2.bf16.msra.mxu0 0
    %259 = vmatprep.subr.bf16.mxu0 0
    %260 = vmatpush2.bf16.msra.mxu0 0
    %261 = vmatprep.mubr.bf16.mxu0 0
    %262 = vmatmul.mubr.bf16.gmra.mxu0 %v164
    %v263 = vpop.f32.mrf.mxu0
    %v264 = vadd.f32 0.0, %v263
    %v265 = vpop.f32.mrf.mxu0
    %v266 = vpop.f32.mrf.mxu0
    %v267 = vpop.f32.mrf.mxu0
    %268 = vdwg.mxu0
    %v269 = vpack.c.bf16 %v264, %v264
    %v270 = vld [vmem:[%s4] sm:$0x1]
    %v272 = vpack.i.b16 %v270, %v270
    %v274 = vlaneseq
    %v275 = vshrl.u32 %v274, 7
    %v276 = vsub.s32 0, %v275
    %v277 = vrot.slane %v272, %v276
    %v278 = vadd.bf16 %v269, %v277
    %v279 = vtanh.bf16.pop %v278
    %v280 = vld [vmem:[#allocation8] sm:$0xf]
    %v281 = vld [vmem:[#allocation8 + $0x4] sm:$0xf]
    %v282 = vld [vmem:[#allocation8 + $0x8] sm:$0xf]
    %v283 = vld [vmem:[#allocation8 + $0xc] sm:$0xf]
    %v284 = vld [vmem:[#allocation8 + $0x10] sm:$0xf]
    %v285 = vld [vmem:[#allocation8 + $0x14] sm:$0xf]
    %v286 = vld [vmem:[#allocation8 + $0x18] sm:$0xf]
    %v287 = vld [vmem:[#allocation8 + $0x1c] sm:$0xf]
    %v288 = vld [vmem:[#allocation8 + $0x20] sm:$0xf]
    %v289 = vld [vmem:[#allocation8 + $0x24] sm:$0xf]
    %v290 = vld [vmem:[#allocation8 + $0x28] sm:$0xf]
    %v291 = vld [vmem:[#allocation8 + $0x2c] sm:$0xf]
    %v292 = vld [vmem:[#allocation8 + $0x30] sm:$0xf]
    %v293 = vld [vmem:[#allocation8 + $0x34] sm:$0xf]
    %v294 = vld [vmem:[#allocation8 + $0x38] sm:$0xf]
    %v295 = vld [vmem:[#allocation8 + $0x3c] sm:$0xf]
    %v312 = vunpack.c.l.b16 %v280
    %v313 = vunpack.c.l.b16 %v281
    %v314 = vunpack.c.l.b16 %v282
    %v315 = vunpack.c.l.b16 %v283
    %v316 = vunpack.c.l.b16 %v284
    %v317 = vunpack.c.l.b16 %v285
    %v318 = vunpack.c.l.b16 %v286
    %v319 = vunpack.c.l.b16 %v287
    %v320 = vunpack.c.l.b16 %v288
    %v321 = vunpack.c.l.b16 %v289
    %v322 = vunpack.c.l.b16 %v290
    %v323 = vunpack.c.l.b16 %v291
    %v324 = vunpack.c.l.b16 %v292
    %v325 = vunpack.c.l.b16 %v293
    %v326 = vunpack.c.l.b16 %v294
    %v327 = vunpack.c.l.b16 %v295
    %v328 = vpack.c.b16 %v313, %v312
    %v329 = vpack.c.b16 %v315, %v314
    %v330 = vpack.c.b16 %v317, %v316
    %v331 = vpack.c.b16 %v319, %v318
    %v332 = vpack.c.b16 %v321, %v320
    %v333 = vpack.c.b16 %v323, %v322
    %v334 = vpack.c.b16 %v325, %v324
    %v335 = vpack.c.b16 %v327, %v326
    %344 = vmatprep.subr.bf16.mxu0 0
    %345 = vmatpush1.bf16.msra.mxu0 %v335
    %346 = vmatprep.subr.bf16.mxu0 0
    %347 = vmatpush1.bf16.msra.mxu0 %v334
    %348 = vmatprep.subr.bf16.mxu0 0
    %349 = vmatpush1.bf16.msra.mxu0 %v333
    %350 = vmatprep.subr.bf16.mxu0 0
    %351 = vmatpush1.bf16.msra.mxu0 %v332
    %352 = vmatprep.subr.bf16.mxu0 0
    %353 = vmatpush1.bf16.msra.mxu0 %v331
    %354 = vmatprep.subr.bf16.mxu0 0
    %355 = vmatpush1.bf16.msra.mxu0 %v330
    %356 = vmatprep.subr.bf16.mxu0 0
    %357 = vmatpush1.bf16.msra.mxu0 %v329
    %358 = vmatprep.subr.bf16.mxu0 0
    %359 = vmatpush1.bf16.msra.mxu0 %v328
    %360 = vmatprep.subr.bf16.mxu0 0
    %361 = vmatpush2.bf16.msra.mxu0 0
    %362 = vmatprep.subr.bf16.mxu0 0
    %363 = vmatpush2.bf16.msra.mxu0 0
    %364 = vmatprep.subr.bf16.mxu0 0
    %365 = vmatpush2.bf16.msra.mxu0 0
    %366 = vmatprep.subr.bf16.mxu0 0
    %367 = vmatpush2.bf16.msra.mxu0 0
    %368 = vmatprep.subr.bf16.mxu0 0
    %369 = vmatpush2.bf16.msra.mxu0 0
    %370 = vmatprep.subr.bf16.mxu0 0
    %371 = vmatpush2.bf16.msra.mxu0 0
    %372 = vmatprep.subr.bf16.mxu0 0
    %373 = vmatpush2.bf16.msra.mxu0 0
    %374 = vmatprep.subr.bf16.mxu0 0
    %375 = vmatpush2.bf16.msra.mxu0 0
    %376 = vmatprep.mubr.bf16.mxu0 0
    %377 = vmatmul.mubr.bf16.gmra.mxu0 %v279
    %v378 = vpop.f32.mrf.mxu0
    %v379 = vadd.f32 0.0, %v378
    %v380 = vpop.f32.mrf.mxu0
    %v381 = vpop.f32.mrf.mxu0
    %v382 = vpop.f32.mrf.mxu0
    %383 = vdwg.mxu0
    %v384 = vpack.c.bf16 %v379, %v379
    %v385 = vld [vmem:[%s6] sm:$0x1]
    %v387 = vpack.i.b16 %v385, %v385
    %v389 = vlaneseq
    %v390 = vshrl.u32 %v389, 7
    %v391 = vsub.s32 0, %v390
    %v392 = vrot.slane %v387, %v391
    %v393 = vadd.bf16 %v384, %v392
    %v394 = vtanh.bf16.pop %v393
    %v395 = vld [vmem:[#allocation10] sm:$0xf]
    %v396 = vld [vmem:[#allocation10 + $0x4] sm:$0xf]
    %v397 = vld [vmem:[#allocation10 + $0x8] sm:$0xf]
    %v398 = vld [vmem:[#allocation10 + $0xc] sm:$0xf]
    %v399 = vld [vmem:[#allocation10 + $0x10] sm:$0xf]
    %v400 = vld [vmem:[#allocation10 + $0x14] sm:$0xf]
    %v401 = vld [vmem:[#allocation10 + $0x18] sm:$0xf]
    %v402 = vld [vmem:[#allocation10 + $0x1c] sm:$0xf]
    %v403 = vld [vmem:[#allocation10 + $0x20] sm:$0xf]
    %v404 = vld [vmem:[#allocation10 + $0x24] sm:$0xf]
    %v405 = vld [vmem:[#allocation10 + $0x28] sm:$0xf]
    %v406 = vld [vmem:[#allocation10 + $0x2c] sm:$0xf]
    %v407 = vld [vmem:[#allocation10 + $0x30] sm:$0xf]
    %v408 = vld [vmem:[#allocation10 + $0x34] sm:$0xf]
    %v409 = vld [vmem:[#allocation10 + $0x38] sm:$0xf]
    %v410 = vld [vmem:[#allocation10 + $0x3c] sm:$0xf]
    %v427 = vunpack.c.l.b16 %v395
    %v428 = vunpack.c.l.b16 %v396
    %v429 = vunpack.c.l.b16 %v397
    %v430 = vunpack.c.l.b16 %v398
    %v431 = vunpack.c.l.b16 %v399
    %v432 = vunpack.c.l.b16 %v400
    %v433 = vunpack.c.l.b16 %v401
    %v434 = vunpack.c.l.b16 %v402
    %v435 = vunpack.c.l.b16 %v403
    %v436 = vunpack.c.l.b16 %v404
    %v437 = vunpack.c.l.b16 %v405
    %v438 = vunpack.c.l.b16 %v406
    %v439 = vunpack.c.l.b16 %v407
    %v440 = vunpack.c.l.b16 %v408
    %v441 = vunpack.c.l.b16 %v409
    %v442 = vunpack.c.l.b16 %v410
    %v443 = vpack.c.b16 %v428, %v427
    %v444 = vpack.c.b16 %v430, %v429
    %v445 = vpack.c.b16 %v432, %v431
    %v446 = vpack.c.b16 %v434, %v433
    %v447 = vpack.c.b16 %v436, %v435
    %v448 = vpack.c.b16 %v438, %v437
    %v449 = vpack.c.b16 %v440, %v439
    %v450 = vpack.c.b16 %v442, %v441
    %459 = vmatprep.subr.bf16.mxu0 0
    %460 = vmatpush1.bf16.msra.mxu0 %v450
    %461 = vmatprep.subr.bf16.mxu0 0
    %462 = vmatpush1.bf16.msra.mxu0 %v449
    %463 = vmatprep.subr.bf16.mxu0 0
    %464 = vmatpush1.bf16.msra.mxu0 %v448
    %465 = vmatprep.subr.bf16.mxu0 0
    %466 = vmatpush1.bf16.msra.mxu0 %v447
    %467 = vmatprep.subr.bf16.mxu0 0
    %468 = vmatpush1.bf16.msra.mxu0 %v446
    %469 = vmatprep.subr.bf16.mxu0 0
    %470 = vmatpush1.bf16.msra.mxu0 %v445
    %471 = vmatprep.subr.bf16.mxu0 0
    %472 = vmatpush1.bf16.msra.mxu0 %v444
    %473 = vmatprep.subr.bf16.mxu0 0
    %474 = vmatpush1.bf16.msra.mxu0 %v443
    %475 = vmatprep.subr.bf16.mxu0 0
    %476 = vmatpush2.bf16.msra.mxu0 0
    %477 = vmatprep.subr.bf16.mxu0 0
    %478 = vmatpush2.bf16.msra.mxu0 0
    %479 = vmatprep.subr.bf16.mxu0 0
    %480 = vmatpush2.bf16.msra.mxu0 0
    %481 = vmatprep.subr.bf16.mxu0 0
    %482 = vmatpush2.bf16.msra.mxu0 0
    %483 = vmatprep.subr.bf16.mxu0 0
    %484 = vmatpush2.bf16.msra.mxu0 0
    %485 = vmatprep.subr.bf16.mxu0 0
    %486 = vmatpush2.bf16.msra.mxu0 0
    %487 = vmatprep.subr.bf16.mxu0 0
    %488 = vmatpush2.bf16.msra.mxu0 0
    %489 = vmatprep.subr.bf16.mxu0 0
    %490 = vmatpush2.bf16.msra.mxu0 0
    %491 = vmatprep.mubr.bf16.mxu0 0
    %492 = vmatmul.mubr.bf16.gmra.mxu0 %v394
    %v493 = vpop.f32.mrf.mxu0
    %v494 = vadd.f32 0.0, %v493
    %v495 = vpop.f32.mrf.mxu0
    %v496 = vpop.f32.mrf.mxu0
    %v497 = vpop.f32.mrf.mxu0
    %498 = vdwg.mxu0
    %v499 = vpack.c.bf16 %v494, %v494
    %v500 = vld [vmem:[%s8] sm:$0x1]
    %v502 = vpack.i.b16 %v500, %v500
    %v504 = vlaneseq
    %v505 = vshrl.u32 %v504, 7
    %v506 = vsub.s32 0, %v505
    %v507 = vrot.slane %v502, %v506
    %v508 = vadd.bf16 %v499, %v507
    %v509 = vtanh.bf16.pop %v508
    %510 = vst [vmem:[#allocation11] sm:$0xf] %v509
    // Predicated region
    $region58: #{tpu_custom_call.1} parent=1 // pred_check
      _
    $region59: #{tpu_custom_call.1} parent=1 // pred_check_branch
      %512 = sbr.rel (0) target = $region61
    $region60: #{tpu_custom_call.1} parent=1 // pred_region
      %s514 = ssub.s32 64, 64
      %515 = vsyncadd [#allocation4], %s514
      %s517 = sshll.u32 [#allocation11], 4
      %s518 = int_to_ptr.vmem [resolvable:$true] %s517
      %520 = dma.vmem_to_hbm [thread:$0]  %s518, 64, %s9, [#allocation4]
    $region61: #{tpu_custom_call.1} parent=1 // pred_fallthru
      _
    // Predicated region
    $region62: #{tpu_custom_call.1} parent=1 // pred_check
      _
    $region63: #{tpu_custom_call.1} parent=1 // pred_check_branch
      %522 = sbr.rel (0) target = $region65
    $region64: #{tpu_custom_call.1} parent=1 // pred_region
      %523 = dma.done [#allocation4], 64
    $region65: #{tpu_custom_call.1} parent=1 // pred_fallthru
      _
    %524 = vsyncpa [#allocation3], 1
    %525 = vsyncpa [#allocation6], 1
    %526 = vsyncpa [#allocation9], 1
    %527 = vsyncpa [#allocation4], 1

// kernel: tpu_custom_call.1
$region0: #{tpu_custom_call.1}
  #allocation0 [shape = 'u32[]', space=smem, size = 0x4, offset = 0x4, fixed_abs, tag = 'smem constant byte address 0x4 - core index']
  #allocation1 [shape = 'u32[144,128]{1,0:T(1,128)}', space=vmem, size = 0x12000, scoped, tag = 'internal scratch']
  %s0 = inlined_call_operand.hbm [shape: f32[8,16], index: 0, kind: input, shape index: {}]
  %s1 = inlined_call_operand.hbm [shape: bf16[16,128], index: 1, kind: input, shape index: {}]
  %s2 = inlined_call_operand.vmem [shape: bf16[1,128], index: 2, kind: input, shape index: {}]
  %s3 = inlined_call_operand.hbm [shape: bf16[128,128], index: 3, kind: input, shape index: {}]
  %s4 = inlined_call_operand.vmem [shape: bf16[1,128], index: 4, kind: input, shape index: {}]
  %s5 = inlined_call_operand.hbm [shape: bf16[128,128], index: 5, kind: input, shape index: {}]
  %s6 = inlined_call_operand.vmem [shape: bf16[1,128], index: 6, kind: input, shape index: {}]
  %s7 = inlined_call_operand.hbm [shape: bf16[128,128], index: 7, kind: input, shape index: {}]
  %s8 = inlined_call_operand.vmem [shape: bf16[1,128], index: 8, kind: input, shape index: {}]
  %s9 = inlined_call_operand.hbm [shape: bf16[8,128], index: 9, kind: output, shape index: {}]
  %s10 = sld [smem:[#allocation0]]
  $region66: #{tpu_custom_call.1} parent=0
    _
  %s12 = ssub.s32 1, %s10
  %s13 = scalar_select 0, %s12, %s10
  $region1: #{tpu_custom_call.1} parent=0
    #allocation2 [shape = 'u8[4096]{0}', space=vmem, size = 0x1000, scoped, tag = 'input window, operand 0, single buffered']
    #allocation3 [shape = 's32[1]{0}', space=sflag, size = 0x4, scoped, tag = 'scoped memory for tpu_custom_call.1']
    #allocation4 [shape = 's32[1]{0}', space=sflag, size = 0x4, scoped, tag = 'scoped memory for tpu_custom_call.1']
    #allocation5 [shape = 'u8[4096]{0}', space=vmem, size = 0x1000, scoped, tag = 'input window, operand 1, single buffered']
    #allocation6 [shape = 's32[1]{0}', space=sflag, size = 0x4, scoped, tag = 'scoped memory for tpu_custom_call.1']
    #allocation7 [shape = 'u8[32768]{0}', space=vmem, size = 0x8000, scoped, tag = 'input window, operand 3, single buffered']
    #allocation8 [shape = 'u8[32768]{0}', space=vmem, size = 0x8000, scoped, tag = 'input window, operand 5, single buffered']
    #allocation9 [shape = 's32[1]{0}', space=sflag, size = 0x4, scoped, tag = 'scoped memory for tpu_custom_call.1']
    #allocation10 [shape = 'u8[32768]{0}', space=vmem, size = 0x8000, scoped, tag = 'input window, operand 7, single buffered']
    #allocation11 [shape = 'u8[2048]{0}', space=vmem, size = 0x800, scoped, tag = 'output window, operand 0, single buffered']
    %14 = vsyncpa [#allocation3], 0
    %15 = vsyncpa [#allocation6], 0
    %16 = vsyncpa [#allocation9], 0
    %17 = vsyncpa [#allocation4], 0
    // Predicated region
    $region2: #{tpu_custom_call.1} parent=1 // pred_check
      _
    $region3: #{tpu_custom_call.1} parent=1 // pred_check_branch
      %19 = sbr.rel (0) target = $region5
    $region4: #{tpu_custom_call.1} parent=1 // pred_region
      %s21 = ssub.s32 128, 128
      %22 = vsyncadd [#allocation3], %s21
      %s24 = sshll.u32 [#allocation2], 4
      %s25 = int_to_ptr.vmem [resolvable:$true] %s24
      %27 = dma.hbm_to_vmem [thread:$0]  %s0, 128, %s25, [#allocation3]
    $region5: #{tpu_custom_call.1} parent=1 // pred_fallthru
      _
    // Predicated region
    $region6: #{tpu_custom_call.1} parent=1 // pred_check
      _
    $region7: #{tpu_custom_call.1} parent=1 // pred_check_branch
      %29 = sbr.rel (0) target = $region9
    $region8: #{tpu_custom_call.1} parent=1 // pred_region
      %s31 = ssub.s32 128, 128
      %32 = vsyncadd [#allocation6], %s31
      %s33 = sshll.u32 [#allocation5], 4
      %s34 = int_to_ptr.vmem [resolvable:$true] %s33
      %39 = dma.hbm_to_vmem [thread:$0]  %s1, 128, %s34, [#allocation6], 64, 64, 4
    $region9: #{tpu_custom_call.1} parent=1 // pred_fallthru
      _
    // Predicated region
    $region10: #{tpu_custom_call.1} parent=1 // pred_check
      _
    $region11: #{tpu_custom_call.1} parent=1 // pred_check_branch
      %41 = sbr.rel (0) target = $region13
    $region12: #{tpu_custom_call.1} parent=1 // pred_region
      _
    $region13: #{tpu_custom_call.1} parent=1 // pred_fallthru
      _
    // Predicated region
    $region14: #{tpu_custom_call.1} parent=1 // pred_check
      _
    $region15: #{tpu_custom_call.1} parent=1 // pred_check_branch
      %43 = sbr.rel (0) target = $region17
    $region16: #{tpu_custom_call.1} parent=1 // pred_region
      %s45 = ssub.s32 1024, 1024
      %46 = vsyncadd [#allocation6], %s45
      %s47 = sshll.u32 [#allocation7], 4
      %s48 = int_to_ptr.vmem [resolvable:$true] %s47
      %53 = dma.hbm_to_vmem [thread:$0]  %s3, 1024, %s48, [#allocation6], 64, 64, 4
    $region17: #{tpu_custom_call.1} parent=1 // pred_fallthru
      _
    // Predicated region
    $region18: #{tpu_custom_call.1} parent=1 // pred_check
      _
    $region19: #{tpu_custom_call.1} parent=1 // pred_check_branch
      %55 = sbr.rel (0) target = $region21
    $region20: #{tpu_custom_call.1} parent=1 // pred_region
      _
    $region21: #{tpu_custom_call.1} parent=1 // pred_fallthru
      _
    // Predicated region
    $region22: #{tpu_custom_call.1} parent=1 // pred_check
      _
    $region23: #{tpu_custom_call.1} parent=1 // pred_check_branch
      %57 = sbr.rel (0) target = $region25
    $region24: #{tpu_custom_call.1} parent=1 // pred_region
      %s59 = ssub.s32 1024, 1024
      %60 = vsyncadd [#allocation9], %s59
      %s61 = sshll.u32 [#allocation8], 4
      %s62 = int_to_ptr.vmem [resolvable:$true] %s61
      %67 = dma.hbm_to_vmem [thread:$0]  %s5, 1024, %s62, [#allocation9], 64, 64, 4
    $region25: #{tpu_custom_call.1} parent=1 // pred_fallthru
      _
    // Predicated region
    $region26: #{tpu_custom_call.1} parent=1 // pred_check
      _
    $region27: #{tpu_custom_call.1} parent=1 // pred_check_branch
      %69 = sbr.rel (0) target = $region29
    $region28: #{tpu_custom_call.1} parent=1 // pred_region
      _
    $region29: #{tpu_custom_call.1} parent=1 // pred_fallthru
      _
    // Predicated region
    $region30: #{tpu_custom_call.1} parent=1 // pred_check
      _
    $region31: #{tpu_custom_call.1} parent=1 // pred_check_branch
      %71 = sbr.rel (0) target = $region33
    $region32: #{tpu_custom_call.1} parent=1 // pred_region
      %s73 = ssub.s32 1024, 1024
      %74 = vsyncadd [#allocation9], %s73
      %s75 = sshll.u32 [#allocation10], 4
      %s76 = int_to_ptr.vmem [resolvable:$true] %s75
      %81 = dma.hbm_to_vmem [thread:$0]  %s7, 1024, %s76, [#allocation9], 64, 64, 4
    $region33: #{tpu_custom_call.1} parent=1 // pred_fallthru
      _
    // Predicated region
    $region34: #{tpu_custom_call.1} parent=1 // pred_check
      _
    $region35: #{tpu_custom_call.1} parent=1 // pred_check_branch
      %83 = sbr.rel (0) target = $region37
    $region36: #{tpu_custom_call.1} parent=1 // pred_region
      _
    $region37: #{tpu_custom_call.1} parent=1 // pred_fallthru
      _
    // Predicated region
    $region38: #{tpu_custom_call.1} parent=1 // pred_check
      _
    $region39: #{tpu_custom_call.1} parent=1 // pred_check_branch
      %85 = sbr.rel (0) target = $region41
    $region40: #{tpu_custom_call.1} parent=1 // pred_region
      %86 = dma.done [#allocation3], 128
    $region41: #{tpu_custom_call.1} parent=1 // pred_fallthru
      _
    // Predicated region
    $region42: #{tpu_custom_call.1} parent=1 // pred_check
      _
    $region43: #{tpu_custom_call.1} parent=1 // pred_check_branch
      %88 = sbr.rel (0) target = $region45
    $region44: #{tpu_custom_call.1} parent=1 // pred_region
      %89 = dma.done [#allocation6], 128
    $region45: #{tpu_custom_call.1} parent=1 // pred_fallthru
      _
    // Predicated region
    $region46: #{tpu_custom_call.1} parent=1 // pred_check
      _
    $region47: #{tpu_custom_call.1} parent=1 // pred_check_branch
      %91 = sbr.rel (0) target = $region49
    $region48: #{tpu_custom_call.1} parent=1 // pred_region
      %92 = dma.done [#allocation6], 1024
    $region49: #{tpu_custom_call.1} parent=1 // pred_fallthru
      _
    // Predicated region
    $region50: #{tpu_custom_call.1} parent=1 // pred_check
      _
    $region51: #{tpu_custom_call.1} parent=1 // pred_check_branch
      %94 = sbr.rel (0) target = $region53
    $region52: #{tpu_custom_call.1} parent=1 // pred_region
      %95 = dma.done [#allocation9], 1024
    $region53: #{tpu_custom_call.1} parent=1 // pred_fallthru
      _
    // Predicated region
    $region54: #{tpu_custom_call.1} parent=1 // pred_check
      _
    $region55: #{tpu_custom_call.1} parent=1 // pred_check_branch
      %97 = sbr.rel (0) target = $region57
    $region56: #{tpu_custom_call.1} parent=1 // pred_region
      %98 = dma.done [#allocation9], 1024
    $region57: #{tpu_custom_call.1} parent=1 // pred_fallthru
      _
    %v100 = vld [vmem:[#allocation2] sm:$0xff]
    %v101 = vpack.c.bf16 %v100, %v100
    %v102 = vld [vmem:[#allocation5] sm:$0xf]
    %v103 = vld [vmem:[#allocation5 + $0x4] sm:$0xf]
    %v106 = vunpack.c.l.b16 %v102
    %v107 = vunpack.c.l.b16 %v103
    %v108 = vpack.c.b16 %v107, %v106
    %vm110 = vcmask 130048
    %v112 = vsel %vm110, %v101, 0
    %114 = vmatprep.subr.bf16.mxu0 0
    %115 = vmatpush1.bf16.msra.mxu0 0
    %116 = vmatprep.subr.bf16.mxu0 0
    %117 = vmatpush1.bf16.msra.mxu0 0
    %118 = vmatprep.subr.bf16.mxu0 0
    %119 = vmatpush1.bf16.msra.mxu0 0
    %120 = vmatprep.subr.bf16.mxu0 0
    %121 = vmatpush1.bf16.msra.mxu0 0
    %122 = vmatprep.subr.bf16.mxu0 0
    %123 = vmatpush1.bf16.msra.mxu0 0
    %124 = vmatprep.subr.bf16.mxu0 0
    %125 = vmatpush1.bf16.msra.mxu0 0
    %126 = vmatprep.subr.bf16.mxu0 0
    %127 = vmatpush1.bf16.msra.mxu0 0
    %128 = vmatprep.subr.bf16.mxu0 0
    %129 = vmatpush1.bf16.msra.mxu0 %v108
    %130 = vmatprep.subr.bf16.mxu0 0
    %131 = vmatpush2.bf16.msra.mxu0 0
    %132 = vmatprep.subr.bf16.mxu0 0
    %133 = vmatpush2.bf16.msra.mxu0 0
    %134 = vmatprep.subr.bf16.mxu0 0
    %135 = vmatpush2.bf16.msra.mxu0 0
    %136 = vmatprep.subr.bf16.mxu0 0
    %137 = vmatpush2.bf16.msra.mxu0 0
    %138 = vmatprep.subr.bf16.mxu0 0
    %139 = vmatpush2.bf16.msra.mxu0 0
    %140 = vmatprep.subr.bf16.mxu0 0
    %141 = vmatpush2.bf16.msra.mxu0 0
    %142 = vmatprep.subr.bf16.mxu0 0
    %143 = vmatpush2.bf16.msra.mxu0 0
    %144 = vmatprep.subr.bf16.mxu0 0
    %145 = vmatpush2.bf16.msra.mxu0 0
    %146 = vmatprep.mubr.bf16.mxu0 0
    %147 = vmatmul.mubr.bf16.gmra.mxu0 %v112
    %v148 = vpop.f32.mrf.mxu0
    %v149 = vadd.f32 0.0, %v148
    %v150 = vpop.f32.mrf.mxu0
    %v151 = vpop.f32.mrf.mxu0
    %v152 = vpop.f32.mrf.mxu0
    %153 = vdwg.mxu0
    %v154 = vpack.c.bf16 %v149, %v149
    %v155 = vld [vmem:[%s2] sm:$0x1]
    %v157 = vpack.i.b16 %v155, %v155
    %v159 = vlaneseq
    %v160 = vshrl.u32 %v159, 7
    %v161 = vsub.s32 0, %v160
    %v162 = vrot.slane %v157, %v161
    %v163 = vadd.bf16 %v154, %v162
    %v164 = vtanh.bf16.pop %v163
    %v165 = vld [vmem:[#allocation7] sm:$0xf]
    %v166 = vld [vmem:[#allocation7 + $0x4] sm:$0xf]
    %v167 = vld [vmem:[#allocation7 + $0x8] sm:$0xf]
    %v168 = vld [vmem:[#allocation7 + $0xc] sm:$0xf]
    %v169 = vld [vmem:[#allocation7 + $0x10] sm:$0xf]
    %v170 = vld [vmem:[#allocation7 + $0x14] sm:$0xf]
    %v171 = vld [vmem:[#allocation7 + $0x18] sm:$0xf]
    %v172 = vld [vmem:[#allocation7 + $0x1c] sm:$0xf]
    %v173 = vld [vmem:[#allocation7 + $0x20] sm:$0xf]
    %v174 = vld [vmem:[#allocation7 + $0x24] sm:$0xf]
    %v175 = vld [vmem:[#allocation7 + $0x28] sm:$0xf]
    %v176 = vld [vmem:[#allocation7 + $0x2c] sm:$0xf]
    %v177 = vld [vmem:[#allocation7 + $0x30] sm:$0xf]
    %v178 = vld [vmem:[#allocation7 + $0x34] sm:$0xf]
    %v179 = vld [vmem:[#allocation7 + $0x38] sm:$0xf]
    %v180 = vld [vmem:[#allocation7 + $0x3c] sm:$0xf]
    %v197 = vunpack.c.l.b16 %v165
    %v198 = vunpack.c.l.b16 %v166
    %v199 = vunpack.c.l.b16 %v167
    %v200 = vunpack.c.l.b16 %v168
    %v201 = vunpack.c.l.b16 %v169
    %v202 = vunpack.c.l.b16 %v170
    %v203 = vunpack.c.l.b16 %v171
    %v204 = vunpack.c.l.b16 %v172
    %v205 = vunpack.c.l.b16 %v173
    %v206 = vunpack.c.l.b16 %v174
    %v207 = vunpack.c.l.b16 %v175
    %v208 = vunpack.c.l.b16 %v176
    %v209 = vunpack.c.l.b16 %v177
    %v210 = vunpack.c.l.b16 %v178
    %v211 = vunpack.c.l.b16 %v179
    %v212 = vunpack.c.l.b16 %v180
    %v213 = vpack.c.b16 %v198, %v197
    %v214 = vpack.c.b16 %v200, %v199
    %v215 = vpack.c.b16 %v202, %v201
    %v216 = vpack.c.b16 %v204, %v203
    %v217 = vpack.c.b16 %v206, %v205
    %v218 = vpack.c.b16 %v208, %v207
    %v219 = vpack.c.b16 %v210, %v209
    %v220 = vpack.c.b16 %v212, %v211
    %229 = vmatprep.subr.bf16.mxu0 0
    %230 = vmatpush1.bf16.msra.mxu0 %v220
    %231 = vmatprep.subr.bf16.mxu0 0
    %232 = vmatpush1.bf16.msra.mxu0 %v219
    %233 = vmatprep.subr.bf16.mxu0 0
    %234 = vmatpush1.bf16.msra.mxu0 %v218
    %235 = vmatprep.subr.bf16.mxu0 0
    %236 = vmatpush1.bf16.msra.mxu0 %v217
    %237 = vmatprep.subr.bf16.mxu0 0
    %238 = vmatpush1.bf16.msra.mxu0 %v216
    %239 = vmatprep.subr.bf16.mxu0 0
    %240 = vmatpush1.bf16.msra.mxu0 %v215
    %241 = vmatprep.subr.bf16.mxu0 0
    %242 = vmatpush1.bf16.msra.mxu0 %v214
    %243 = vmatprep.subr.bf16.mxu0 0
    %244 = vmatpush1.bf16.msra.mxu0 %v213
    %245 = vmatprep.subr.bf16.mxu0 0
    %246 = vmatpush2.bf16.msra.mxu0 0
    %247 = vmatprep.subr.bf16.mxu0 0
    %248 = vmatpush2.bf16.msra.mxu0 0
    %249 = vmatprep.subr.bf16.mxu0 0
    %250 = vmatpush2.bf16.msra.mxu0 0
    %251 = vmatprep.subr.bf16.mxu0 0
    %252 = vmatpush2.bf16.msra.mxu0 0
    %253 = vmatprep.subr.bf16.mxu0 0
    %254 = vmatpush2.bf16.msra.mxu0 0
    %255 = vmatprep.subr.bf16.mxu0 0
    %256 = vmatpush2.bf16.msra.mxu0 0
    %257 = vmatprep.subr.bf16.mxu0 0
    %258 = vmatpush2.bf16.msra.mxu0 0
    %259 = vmatprep.subr.bf16.mxu0 0
    %260 = vmatpush2.bf16.msra.mxu0 0
    %261 = vmatprep.mubr.bf16.mxu0 0
    %262 = vmatmul.mubr.bf16.gmra.mxu0 %v164
    %v263 = vpop.f32.mrf.mxu0
    %v264 = vadd.f32 0.0, %v263
    %v265 = vpop.f32.mrf.mxu0
    %v266 = vpop.f32.mrf.mxu0
    %v267 = vpop.f32.mrf.mxu0
    %268 = vdwg.mxu0
    %v269 = vpack.c.bf16 %v264, %v264
    %v270 = vld [vmem:[%s4] sm:$0x1]
    %v272 = vpack.i.b16 %v270, %v270
    %v274 = vlaneseq
    %v275 = vshrl.u32 %v274, 7
    %v276 = vsub.s32 0, %v275
    %v277 = vrot.slane %v272, %v276
    %v278 = vadd.bf16 %v269, %v277
    %v279 = vtanh.bf16.pop %v278
    %v280 = vld [vmem:[#allocation8] sm:$0xf]
    %v281 = vld [vmem:[#allocation8 + $0x4] sm:$0xf]
    %v282 = vld [vmem:[#allocation8 + $0x8] sm:$0xf]
    %v283 = vld [vmem:[#allocation8 + $0xc] sm:$0xf]
    %v284 = vld [vmem:[#allocation8 + $0x10] sm:$0xf]
    %v285 = vld [vmem:[#allocation8 + $0x14] sm:$0xf]
    %v286 = vld [vmem:[#allocation8 + $0x18] sm:$0xf]
    %v287 = vld [vmem:[#allocation8 + $0x1c] sm:$0xf]
    %v288 = vld [vmem:[#allocation8 + $0x20] sm:$0xf]
    %v289 = vld [vmem:[#allocation8 + $0x24] sm:$0xf]
    %v290 = vld [vmem:[#allocation8 + $0x28] sm:$0xf]
    %v291 = vld [vmem:[#allocation8 + $0x2c] sm:$0xf]
    %v292 = vld [vmem:[#allocation8 + $0x30] sm:$0xf]
    %v293 = vld [vmem:[#allocation8 + $0x34] sm:$0xf]
    %v294 = vld [vmem:[#allocation8 + $0x38] sm:$0xf]
    %v295 = vld [vmem:[#allocation8 + $0x3c] sm:$0xf]
    %v312 = vunpack.c.l.b16 %v280
    %v313 = vunpack.c.l.b16 %v281
    %v314 = vunpack.c.l.b16 %v282
    %v315 = vunpack.c.l.b16 %v283
    %v316 = vunpack.c.l.b16 %v284
    %v317 = vunpack.c.l.b16 %v285
    %v318 = vunpack.c.l.b16 %v286
    %v319 = vunpack.c.l.b16 %v287
    %v320 = vunpack.c.l.b16 %v288
    %v321 = vunpack.c.l.b16 %v289
    %v322 = vunpack.c.l.b16 %v290
    %v323 = vunpack.c.l.b16 %v291
    %v324 = vunpack.c.l.b16 %v292
    %v325 = vunpack.c.l.b16 %v293
    %v326 = vunpack.c.l.b16 %v294
    %v327 = vunpack.c.l.b16 %v295
    %v328 = vpack.c.b16 %v313, %v312
    %v329 = vpack.c.b16 %v315, %v314
    %v330 = vpack.c.b16 %v317, %v316
    %v331 = vpack.c.b16 %v319, %v318
    %v332 = vpack.c.b16 %v321, %v320
    %v333 = vpack.c.b16 %v323, %v322
    %v334 = vpack.c.b16 %v325, %v324
    %v335 = vpack.c.b16 %v327, %v326
    %344 = vmatprep.subr.bf16.mxu0 0
    %345 = vmatpush1.bf16.msra.mxu0 %v335
    %346 = vmatprep.subr.bf16.mxu0 0
    %347 = vmatpush1.bf16.msra.mxu0 %v334
    %348 = vmatprep.subr.bf16.mxu0 0
    %349 = vmatpush1.bf16.msra.mxu0 %v333
    %350 = vmatprep.subr.bf16.mxu0 0
    %351 = vmatpush1.bf16.msra.mxu0 %v332
    %352 = vmatprep.subr.bf16.mxu0 0
    %353 = vmatpush1.bf16.msra.mxu0 %v331
    %354 = vmatprep.subr.bf16.mxu0 0
    %355 = vmatpush1.bf16.msra.mxu0 %v330
    %356 = vmatprep.subr.bf16.mxu0 0
    %357 = vmatpush1.bf16.msra.mxu0 %v329
    %358 = vmatprep.subr.bf16.mxu0 0
    %359 = vmatpush1.bf16.msra.mxu0 %v328
    %360 = vmatprep.subr.bf16.mxu0 0
    %361 = vmatpush2.bf16.msra.mxu0 0
    %362 = vmatprep.subr.bf16.mxu0 0
    %363 = vmatpush2.bf16.msra.mxu0 0
    %364 = vmatprep.subr.bf16.mxu0 0
    %365 = vmatpush2.bf16.msra.mxu0 0
    %366 = vmatprep.subr.bf16.mxu0 0
    %367 = vmatpush2.bf16.msra.mxu0 0
    %368 = vmatprep.subr.bf16.mxu0 0
    %369 = vmatpush2.bf16.msra.mxu0 0
    %370 = vmatprep.subr.bf16.mxu0 0
    %371 = vmatpush2.bf16.msra.mxu0 0
    %372 = vmatprep.subr.bf16.mxu0 0
    %373 = vmatpush2.bf16.msra.mxu0 0
    %374 = vmatprep.subr.bf16.mxu0 0
    %375 = vmatpush2.bf16.msra.mxu0 0
    %376 = vmatprep.mubr.bf16.mxu0 0
    %377 = vmatmul.mubr.bf16.gmra.mxu0 %v279
    %v378 = vpop.f32.mrf.mxu0
    %v379 = vadd.f32 0.0, %v378
    %v380 = vpop.f32.mrf.mxu0
    %v381 = vpop.f32.mrf.mxu0
    %v382 = vpop.f32.mrf.mxu0
    %383 = vdwg.mxu0
    %v384 = vpack.c.bf16 %v379, %v379
    %v385 = vld [vmem:[%s6] sm:$0x1]
    %v387 = vpack.i.b16 %v385, %v385
    %v389 = vlaneseq
    %v390 = vshrl.u32 %v389, 7
    %v391 = vsub.s32 0, %v390
    %v392 = vrot.slane %v387, %v391
    %v393 = vadd.bf16 %v384, %v392
    %v394 = vtanh.bf16.pop %v393
    %v395 = vld [vmem:[#allocation10] sm:$0xf]
    %v396 = vld [vmem:[#allocation10 + $0x4] sm:$0xf]
    %v397 = vld [vmem:[#allocation10 + $0x8] sm:$0xf]
    %v398 = vld [vmem:[#allocation10 + $0xc] sm:$0xf]
    %v399 = vld [vmem:[#allocation10 + $0x10] sm:$0xf]
    %v400 = vld [vmem:[#allocation10 + $0x14] sm:$0xf]
    %v401 = vld [vmem:[#allocation10 + $0x18] sm:$0xf]
    %v402 = vld [vmem:[#allocation10 + $0x1c] sm:$0xf]
    %v403 = vld [vmem:[#allocation10 + $0x20] sm:$0xf]
    %v404 = vld [vmem:[#allocation10 + $0x24] sm:$0xf]
    %v405 = vld [vmem:[#allocation10 + $0x28] sm:$0xf]
    %v406 = vld [vmem:[#allocation10 + $0x2c] sm:$0xf]
    %v407 = vld [vmem:[#allocation10 + $0x30] sm:$0xf]
    %v408 = vld [vmem:[#allocation10 + $0x34] sm:$0xf]
    %v409 = vld [vmem:[#allocation10 + $0x38] sm:$0xf]
    %v410 = vld [vmem:[#allocation10 + $0x3c] sm:$0xf]
    %v427 = vunpack.c.l.b16 %v395
    %v428 = vunpack.c.l.b16 %v396
    %v429 = vunpack.c.l.b16 %v397
    %v430 = vunpack.c.l.b16 %v398
    %v431 = vunpack.c.l.b16 %v399
    %v432 = vunpack.c.l.b16 %v400
    %v433 = vunpack.c.l.b16 %v401
    %v434 = vunpack.c.l.b16 %v402
    %v435 = vunpack.c.l.b16 %v403
    %v436 = vunpack.c.l.b16 %v404
    %v437 = vunpack.c.l.b16 %v405
    %v438 = vunpack.c.l.b16 %v406
    %v439 = vunpack.c.l.b16 %v407
    %v440 = vunpack.c.l.b16 %v408
    %v441 = vunpack.c.l.b16 %v409
    %v442 = vunpack.c.l.b16 %v410
    %v443 = vpack.c.b16 %v428, %v427
    %v444 = vpack.c.b16 %v430, %v429
    %v445 = vpack.c.b16 %v432, %v431
    %v446 = vpack.c.b16 %v434, %v433
    %v447 = vpack.c.b16 %v436, %v435
    %v448 = vpack.c.b16 %v438, %v437
    %v449 = vpack.c.b16 %v440, %v439
    %v450 = vpack.c.b16 %v442, %v441
    %459 = vmatprep.subr.bf16.mxu0 0
    %460 = vmatpush1.bf16.msra.mxu0 %v450
    %461 = vmatprep.subr.bf16.mxu0 0
    %462 = vmatpush1.bf16.msra.mxu0 %v449
    %463 = vmatprep.subr.bf16.mxu0 0
    %464 = vmatpush1.bf16.msra.mxu0 %v448
    %465 = vmatprep.subr.bf16.mxu0 0
    %466 = vmatpush1.bf16.msra.mxu0 %v447
    %467 = vmatprep.subr.bf16.mxu0 0
    %468 = vmatpush1.bf16.msra.mxu0 %v446
    %469 = vmatprep.subr.bf16.mxu0 0
    %470 = vmatpush1.bf16.msra.mxu0 %v445
    %471 = vmatprep.subr.bf16.mxu0 0
    %472 = vmatpush1.bf16.msra.mxu0 %v444
    %473 = vmatprep.subr.bf16.mxu0 0
    %474 = vmatpush1.bf16.msra.mxu0 %v443
    %475 = vmatprep.subr.bf16.mxu0 0
    %476 = vmatpush2.bf16.msra.mxu0 0
    %477 = vmatprep.subr.bf16.mxu0 0
    %478 = vmatpush2.bf16.msra.mxu0 0
    %479 = vmatprep.subr.bf16.mxu0 0
    %480 = vmatpush2.bf16.msra.mxu0 0
    %481 = vmatprep.subr.bf16.mxu0 0
    %482 = vmatpush2.bf16.msra.mxu0 0
    %483 = vmatprep.subr.bf16.mxu0 0
    %484 = vmatpush2.bf16.msra.mxu0 0
    %485 = vmatprep.subr.bf16.mxu0 0
    %486 = vmatpush2.bf16.msra.mxu0 0
    %487 = vmatprep.subr.bf16.mxu0 0
    %488 = vmatpush2.bf16.msra.mxu0 0
    %489 = vmatprep.subr.bf16.mxu0 0
    %490 = vmatpush2.bf16.msra.mxu0 0
    %491 = vmatprep.mubr.bf16.mxu0 0
    %492 = vmatmul.mubr.bf16.gmra.mxu0 %v394
    %v493 = vpop.f32.mrf.mxu0
    %v494 = vadd.f32 0.0, %v493
    %v495 = vpop.f32.mrf.mxu0
    %v496 = vpop.f32.mrf.mxu0
    %v497 = vpop.f32.mrf.mxu0
    %498 = vdwg.mxu0
    %v499 = vpack.c.bf16 %v494, %v494
    %v500 = vld [vmem:[%s8] sm:$0x1]
    %v502 = vpack.i.b16 %v500, %v500
    %v504 = vlaneseq
    %v505 = vshrl.u32 %v504, 7
    %v506 = vsub.s32 0, %v505
    %v507 = vrot.slane %v502, %v506
    %v508 = vadd.bf16 %v499, %v507
    %v509 = vtanh.bf16.pop %v508
    %510 = vst [vmem:[#allocation11] sm:$0xf] %v509
    // Predicated region
    $region58: #{tpu_custom_call.1} parent=1 // pred_check
      _
    $region59: #{tpu_custom_call.1} parent=1 // pred_check_branch
      %512 = sbr.rel (0) target = $region61
    $region60: #{tpu_custom_call.1} parent=1 // pred_region
      %s514 = ssub.s32 64, 64
      %515 = vsyncadd [#allocation4], %s514
      %s517 = sshll.u32 [#allocation11], 4
      %s518 = int_to_ptr.vmem [resolvable:$true] %s517
      %520 = dma.vmem_to_hbm [thread:$0]  %s518, 64, %s9, [#allocation4]
    $region61: #{tpu_custom_call.1} parent=1 // pred_fallthru
      _
    // Predicated region
    $region62: #{tpu_custom_call.1} parent=1 // pred_check
      _
    $region63: #{tpu_custom_call.1} parent=1 // pred_check_branch
      %522 = sbr.rel (0) target = $region65
    $region64: #{tpu_custom_call.1} parent=1 // pred_region
      %523 = dma.done [#allocation4], 64
    $region65: #{tpu_custom_call.1} parent=1 // pred_fallthru
      _
    %524 = vsyncpa [#allocation3], 1
    %525 = vsyncpa [#allocation6], 1
    %526 = vsyncpa [#allocation9], 1
    %527 = vsyncpa [#allocation4], 1

</llo_original>
